<compile_context>
chip_gen: v5e
topology: v5e:2x2
jax: 0.10.0
libtpu: 0.0.40
codegen_flags: <defaults>
</compile_context>

<pallas_src>
import functools

import jax
import jax.numpy as jnp
from jax.experimental import pallas as pl
from jax.experimental.pallas import tpu as pltpu


_VMEM_TILE_BUDGET = 40 * 1024 * 1024   # block allocations (double-buffered)
_VMEM_LIMIT_BYTES = 48 * 1024 * 1024   # <= v7x 64 MiB physical, with headroom


def _round_up(a: int, b: int) -> int:
    return (a + b - 1) // b * b


def _pick_tm(B: int):
    """Largest power-of-two batch tile whose padding waste stays <= ~25%."""
    B8 = _round_up(max(B, 1), 8)
    for tm in (512, 256, 128, 64, 32, 16, 8):
        B_pad = _round_up(B8, tm)
        if B_pad - B <= B_pad // 4:
            return tm, B_pad
    return 8, B8


def _vmem_block_bytes(tm, tn, Di, x_bytes, mm_bytes, out_bytes):
    # Each operand's pipeline buffers are double-buffered.
    return 2 * (tm * Di * x_bytes      # activation row slab (matmul + residual)
                + Di * tn * mm_bytes   # prepared weight column slab
                + tn * 4               # bias
                + tm * tn * out_bytes) # output tile


def _resblock_kernel(x_ref, wt_ref, b_ref, o_ref, *, tn, mm_dtype):
    # x_ref : (tm, D_pad)  activations, original dtype (matmul + residual src)
    # wt_ref: (D_pad, tn)  prepared weight slab, W^T layout, mm_dtype
    # b_ref : (1,  tn)     bias, float32
    # o_ref : (tm, tn)     output tile
    j = pl.program_id(0)                       # N-tile index (outer grid axis)

    h = jnp.dot(x_ref[...].astype(mm_dtype), wt_ref[...],
                preferred_element_type=jnp.float32)
    h = jnp.maximum(h + b_ref[...], 0.0)       # bias + ReLU in f32

    col = pl.multiple_of(j * tn, 128)          # lane-aligned residual slice
    x_res = x_ref[:, pl.ds(col, tn)].astype(jnp.float32)
    o_ref[...] = (x_res + h).astype(o_ref.dtype)


def prepare_resblock_params(weight, bias, *, mm_dtype):
    """One-time parameter prep (call at model load, NOT per forward pass).

    weight: (D_out, D_in) PyTorch nn.Linear layout; bias: (D_out,).
    Returns (W^T padded to 128-multiples and cast to mm_dtype,
             bias padded to (1, D_out_pad) in float32).
    """
    D_out, D_in = weight.shape
    Di, Do = _round_up(D_in, 128), _round_up(D_out, 128)
    wt = jnp.transpose(weight)                       # (D_in, D_out)
    if (Di, Do) != (D_in, D_out):
        wt = jnp.zeros((Di, Do), weight.dtype).at[:D_in, :D_out].set(wt)
    wt = wt.astype(mm_dtype)
    b = bias.astype(jnp.float32)
    if Do != D_out:
        b = jnp.zeros((Do,), jnp.float32).at[:D_out].set(b)
    return wt, b.reshape(1, Do)


def resblock_prepared(x, wt_p, b_p, *, d_out, tm=None, tn=None):
    """Apply ResBlock with pre-prepared params. x: (B, D_in)."""
    B, D_in = x.shape
    Di, Do = wt_p.shape
    if Di != _round_up(D_in, 128):
        raise ValueError("prepared weight does not match x feature dim")
    if d_out != D_in:
        raise ValueError("residual add requires output_dim == input_dim")
    out_dtype = x.dtype
    mm_dtype = wt_p.dtype
    x_bytes = jnp.dtype(x.dtype).itemsize
    mm_bytes = jnp.dtype(mm_dtype).itemsize
    out_bytes = jnp.dtype(out_dtype).itemsize

    # ---- batch tile: bound padded-row waste instead of blindly rounding up --
    user_tm = tm is not None
    if tm is None:
        tm, B_pad = _pick_tm(B)
    else:
        assert tm % 8 == 0
        B_pad = _round_up(max(B, 8), tm)

    # ---- feature tile: lane dense, >=2 N-tiles for v7x megacore when there
    #      is only one batch tile, and everything fits the VMEM budget -------
    if tn is None:
        tn_cands = [c for c in (1024, 512, 256, 128) if Do % c == 0]
        if B_pad // tm == 1 and Do >= 256:
            tn_cands = [c for c in tn_cands if c <= Do // 2] or [128]
        while True:
            fits = [c for c in tn_cands
                    if _vmem_block_bytes(tm, c, Di, x_bytes, mm_bytes,
                                         out_bytes) <= _VMEM_TILE_BUDGET]
            if fits:
                tn = max(fits)
                break
            if not user_tm and tm > 8:
                tm //= 2            # powers of two: B_pad stays divisible
            else:
                # TODO(synk): add a K-reduction grid axis (f32 accumulator
                # scratch) for feature dims too large to keep fully VMEM
                # resident; not a ResBlock-sized regime.
                raise ValueError("feature dim too large for full-K tiling")
    else:
        assert tn % 128 == 0 and Do % tn == 0

    m_tiles = B_pad // tm
    n_tiles = Do // tn

    # Pad x once, in its own dtype (the matmul cast happens in-kernel).
    x_p = x
    if (B_pad, Di) != (B, D_in):
        x_p = jnp.zeros((B_pad, Di), x.dtype).at[:B, :D_in].set(x)

    kernel = functools.partial(_resblock_kernel, tn=tn, mm_dtype=mm_dtype)
    # Grid: N-tiles OUTER, M-tiles inner -> the weight block index only changes
    # on the outer axis, so the big W^T slab is DMA'd from HBM once per call.
    out = pl.pallas_call(
        kernel,
        out_shape=jax.ShapeDtypeStruct((B_pad, Do), out_dtype),
        grid_spec=pltpu.PrefetchScalarGridSpec(
            num_scalar_prefetch=0,
            grid=(n_tiles, m_tiles),
            in_specs=[
                pl.BlockSpec((tm, Di), lambda j, i: (i, 0)),   # x row slab
                pl.BlockSpec((Di, tn), lambda j, i: (0, j)),   # W^T column slab
                pl.BlockSpec((1, tn), lambda j, i: (0, j)),    # bias
            ],
            out_specs=pl.BlockSpec((tm, tn), lambda j, i: (i, j)),
        ),
        compiler_params=pltpu.CompilerParams(
            dimension_semantics=("parallel", "parallel"),
            vmem_limit_bytes=_VMEM_LIMIT_BYTES,
        ),
    )(x_p, wt_p, b_p)

    if (B_pad, Do) != (B, d_out):
        out = out[:B, :d_out]
    return out


def resblock(x, weight, bias, *, use_bf16_matmul=None, tm=None, tn=None):
    """Convenience wrapper taking PyTorch-layout (D_out, D_in) weight.

    In a real model, call prepare_resblock_params once at load time and
    resblock_prepared per forward step to avoid per-call weight prep.
    bf16 matmul operands are the default for f32 inputs (f32 accumulate /
    bias / ReLU / residual); pass use_bf16_matmul=False for exact f32.
    """
    D_out, D_in = weight.shape
    assert x.shape[-1] == D_in, "weight last dim must match x feature dim"
    assert D_out == D_in, "ResBlock residual needs output_dim == input_dim"
    if use_bf16_matmul is None:
        use_bf16_matmul = (x.dtype == jnp.float32)
    mm_dtype = jnp.bfloat16 if use_bf16_matmul else x.dtype
    wt_p, b_p = prepare_resblock_params(weight, bias, mm_dtype=mm_dtype)
    return resblock_prepared(x, wt_p, b_p, d_out=D_out, tm=tm, tn=tn)


if __name__ == "__main__":
    key = jax.random.PRNGKey(0)
    k_x, k_w, k_b = jax.random.split(key, 3)

    B, D = 8, 256
    x = jax.random.normal(k_x, (B, D), dtype=jnp.float32)
    bound = 1.0 / jnp.sqrt(D)
    weight = jax.random.uniform(k_w, (D, D), minval=-bound, maxval=bound,
                                dtype=jnp.float32)
    bias = jax.random.uniform(k_b, (D,), minval=-bound, maxval=bound,
                              dtype=jnp.float32)

    ref = x + jnp.maximum(x @ weight.T + bias, 0.0)

    # 1) Exact f32 path; m_tiles==1 so tn is capped at D/2 -> grid (2, 1).
    out = jax.block_until_ready(resblock(x, weight, bias,
                                         use_bf16_matmul=False))
    assert out.shape == (B, D)
    assert jnp.allclose(out, ref, atol=1e-5, rtol=1e-5), "f32 path mismatch"

    # 2) Multi-tile grid: B=40 -> tm=16 (3 row tiles), force tn=128 (2 column
    #    tiles); the weight slab stays VMEM-resident across the inner row loop.
    B2 = 40
    x2 = jax.random.normal(k_x, (B2, D), dtype=jnp.float32)
    ref2 = x2 + jnp.maximum(x2 @ weight.T + bias, 0.0)
    out2 = jax.block_until_ready(resblock(x2, weight, bias,
                                          use_bf16_matmul=False, tn=128))
    assert out2.shape == (B2, D)
    assert jnp.allclose(out2, ref2, atol=1e-5, rtol=1e-5), "multi-tile mismatch"

    # 3) Non-aligned shape exercises the zero-padding path.
    B3, D3 = 5, 96
    x3 = jax.random.normal(k_x, (B3, D3), dtype=jnp.float32)
    w3 = jax.random.uniform(k_w, (D3, D3), minval=-0.1, maxval=0.1,
                            dtype=jnp.float32)
    b3 = jax.random.uniform(k_b, (D3,), minval=-0.1, maxval=0.1,
                            dtype=jnp.float32)
    ref3 = x3 + jnp.maximum(x3 @ w3.T + b3, 0.0)
    out3 = jax.block_until_ready(resblock(x3, w3, b3, use_bf16_matmul=False))
    assert out3.shape == (B3, D3)
    assert jnp.allclose(out3, ref3, atol=1e-5, rtol=1e-5), "padded-path mismatch"

    # 4) Default path: bf16 MXU operands, f32 accumulate/epilogue ->
    #    loose tolerance from operand rounding only.
    out4 = jax.block_until_ready(resblock(x, weight, bias))
    assert jnp.allclose(out4, ref, atol=5e-2, rtol=5e-2), "bf16 path mismatch"

    # 5) Prepared-params path (what a real model does once at load time).
    wt_p, b_p = prepare_resblock_params(weight, bias, mm_dtype=jnp.bfloat16)
    out5 = jax.block_until_ready(resblock_prepared(x, wt_p, b_p, d_out=D))
    assert jnp.allclose(out5, ref, atol=5e-2, rtol=5e-2), "prepared-path mismatch"

    print("KERNEL_OK")
</pallas_src>

<mosaic_0001>
module attributes {stable_mosaic.version = 11 : i64} {
  func.func @_resblock_kernel(%arg0: i32, %arg1: i32, %arg2: memref<8x256xf32, #tpu.memory_space<vmem>>, %arg3: memref<256x128xf32, #tpu.memory_space<vmem>>, %arg4: memref<1x128xf32, #tpu.memory_space<vmem>>, %arg5: memref<8x128xf32, #tpu.memory_space<vmem>>) attributes {dimension_semantics = [#tpu.dimension_semantics<parallel>, #tpu.dimension_semantics<parallel>], iteration_bounds = array<i64: 2, 1>, scalar_prefetch = 0 : i64, scratch_operands = 0 : i64, tpu.core_type = #tpu.core_type<tc>, window_params = [{transform_indices = @transform_0, window_bounds = array<i64: 8, 256>}, {transform_indices = @transform_1, window_bounds = array<i64: 256, 128>}, {transform_indices = @transform_2, window_bounds = array<i64: 1, 128>}, {transform_indices = @transform_3, window_bounds = array<i64: 8, 128>}]} {
    %c0 = arith.constant 0 : index
    %c0_0 = arith.constant 0 : index
    %0 = vector.load %arg2[%c0, %c0_0] : memref<8x256xf32, #tpu.memory_space<vmem>>, vector<8x256xf32>
    %c0_1 = arith.constant 0 : index
    %c0_2 = arith.constant 0 : index
    %1 = vector.load %arg3[%c0_1, %c0_2] : memref<256x128xf32, #tpu.memory_space<vmem>>, vector<256x128xf32>
    %cst = arith.constant dense<0.000000e+00> : vector<8x128xf32>
    %2 = tpu.matmul %0, %1, %cst {dimension_numbers = #tpu.dot_dimension_numbers<[1], [0], [0], [1], [0, 0, 1, 1], [], []>} : vector<8x256xf32>, vector<256x128xf32>, vector<8x128xf32> -> vector<8x128xf32>
    %c0_3 = arith.constant 0 : index
    %c0_4 = arith.constant 0 : index
    %3 = vector.load %arg4[%c0_3, %c0_4] : memref<1x128xf32, #tpu.memory_space<vmem>>, vector<1x128xf32>
    %4 = vector.broadcast %3 : vector<1x128xf32> to vector<8x128xf32>
    %5 = arith.addf %2, %4 : vector<8x128xf32>
    %cst_5 = arith.constant 0.000000e+00 : f32
    %6 = vector.broadcast %cst_5 : f32 to vector<8x128xf32>
    %7 = arith.maximumf %5, %6 : vector<8x128xf32>
    %c128_i32 = arith.constant 128 : i32
    %8 = arith.muli %arg0, %c128_i32 : i32
    %9 = tpu.assume_multiple %8, 128 : i32
    %c0_6 = arith.constant 0 : index
    %10 = arith.index_cast %9 : i32 to index
    %11 = vector.load %arg2[%c0_6, %10] : memref<8x256xf32, #tpu.memory_space<vmem>>, vector<8x128xf32>
    %12 = arith.addf %11, %7 : vector<8x128xf32>
    %c0_7 = arith.constant 0 : index
    %c0_8 = arith.constant 0 : index
    %13 = vector.load %arg5[%c0_7, %c0_8] : memref<8x128xf32, #tpu.memory_space<vmem>>, vector<8x128xf32>
    tpu.vector_store %arg5[%c0_7, %c0_8], %12 {strides = array<i32>} : memref<8x128xf32, #tpu.memory_space<vmem>>, vector<8x128xf32>,
    return
  }
  func.func @transform_0(%arg0: i32, %arg1: i32) -> (i32, i32) {
    %c0_i32 = arith.constant 0 : i32
    %c0_i32_0 = arith.constant 0 : i32
    return %arg1, %c0_i32 : i32, i32
  }
  func.func @transform_1(%arg0: i32, %arg1: i32) -> (i32, i32) {
    %c0_i32 = arith.constant 0 : i32
    %c0_i32_0 = arith.constant 0 : i32
    return %c0_i32, %arg0 : i32, i32
  }
  func.func @transform_2(%arg0: i32, %arg1: i32) -> (i32, i32) {
    %c0_i32 = arith.constant 0 : i32
    %c0_i32_0 = arith.constant 0 : i32
    return %c0_i32, %arg0 : i32, i32
  }
  func.func @transform_3(%arg0: i32, %arg1: i32) -> (i32, i32) {
    %c0_i32 = arith.constant 0 : i32
    return %arg1, %arg0 : i32, i32
  }
}

</mosaic_0001>

<llo_original>
// kernel: tpu_custom_call.1
$region0: #{tpu_custom_call.1}
  #allocation0 [shape = 'u32[]', space=smem, size = 0x4, offset = 0x4, fixed_abs, tag = 'smem constant byte address 0x4 - core index']
  #allocation1 [shape = 'u32[72,128]{1,0:T(1,128)}', space=vmem, size = 0x9000, scoped, tag = 'internal scratch']
  %s0 = inlined_call_operand.hbm [shape: f32[8,256], index: 0, kind: input, shape index: {}]
  %s1 = inlined_call_operand.hbm [shape: f32[256,256], index: 1, kind: input, shape index: {}]
  %s2 = inlined_call_operand.hbm [shape: f32[1,256], index: 2, kind: input, shape index: {}]
  %s3 = inlined_call_operand.hbm [shape: f32[8,256], index: 3, kind: output, shape index: {}]
  %s4 = sld [smem:[#allocation0]]
  $region57: #{tpu_custom_call.1} parent=0
    _
  %s6 = ssub.s32 1, %s4
  %s7 = scalar_select 0, %s6, %s4
  $region1: #{tpu_custom_call.1} parent=0
    #allocation2 [shape = 'u8[8192]{0}', space=vmem, size = 0x2000, scoped, tag = 'input window, operand 0, single buffered']
    #allocation3 [shape = 's32[2]{0}', space=sflag, size = 0x8, scoped, tag = 'scoped memory for tpu_custom_call.1']
    #allocation4 [shape = 's32[2]{0}', space=sflag, size = 0x8, scoped, tag = 'scoped memory for tpu_custom_call.1']
    #allocation5 [shape = 'u8[262144]{0}', space=vmem, size = 0x40000, scoped, tag = 'input window, operand 1']
    #allocation6 [shape = 's32[2]{0}', space=sflag, size = 0x8, scoped, tag = 'scoped memory for tpu_custom_call.1']
    #allocation7 [shape = 'u8[1024]{0}', space=vmem, size = 0x400, scoped, tag = 'input window, operand 2']
    #allocation8 [shape = 'u8[8192]{0}', space=vmem, size = 0x2000, scoped, tag = 'output window, operand 0']
    %8 = vsyncpa [#allocation3], 0
    %9 = vsyncpa [#allocation6], 0
    %s10 = scalar_lea.sflag [#allocation6], 1
    %11 = vsyncpa %s10, 0
    %12 = vsyncpa [#allocation4], 0
    %s13 = scalar_lea.sflag [#allocation4], 1
    %14 = vsyncpa %s13, 0
    loop: start=0, step=1, limit=4
    $region2: #{tpu_custom_call.1} parent=1 // loop_pre_header
      _
    $region3: #{tpu_custom_call.1} parent=1 // loop_header
      %s16 = sphi 0, %s20
      %p17 = scmp.ge.s32.totalorder %s16, 4
      %s23 = sphi 0, %s35
      %s24 = sphi 0, %s31
      %s25 = sphi 0, %s23
      %s26 = sphi 0, %s24
      %s27 = sphi 0, %s25
      %s28 = sphi 0, %s26
      %s38 = sphi 0, %s40
      %s41 = sphi 0, %s38
      %s42 = sphi 0, %s41
      %s58 = sphi 0, %s42
      %s64 = sphi 0, %s66
      %s67 = sphi 0, %s64
      %s68 = sphi 0, %s67
      %s84 = sphi 0, %s68
      %s90 = sphi 0, %s92
      %s93 = sphi 0, %s90
      %s94 = sphi 0, %s93
      %s110 = sphi 0, %s94
      %s118 = sphi 0, %s120
      %s121 = sphi 0, %s118
      %s122 = sphi 0, %s121
      %s138 = sphi 0, %s122
    $region4: #{tpu_custom_call.1} parent=1 // loop_header_branch
      %19 = sbr.rel (%p17) target = $region8
    $region5: #{tpu_custom_call.1} parent=1 // loop_body
      %s21 = ssub.s32 %s16, 1
      %s22 = ssub.s32 %s16, 2
      %s29 = sadd.s32 1, %s24
      %p30 = scmp.ge.s32.totalorder %s29, 1
      %s31 = scalar_select %p30, 0, %s29
      %s32 = sadd.s32 1, %s23
      %s33 = scalar_select %p30, %s32, %s23
      %p34 = scmp.ge.s32.totalorder %s33, 2
      %s35 = scalar_select %p34, 0, %s33
      %s36 = ssub.s32 %s24, %s31
      %p37 = scmp.eq.s32.totalorder %s36, 0
      %s39 = sadd.s32 %s38, 1
      %s40 = scalar_select %p37, %s38, %s39
      %p43 = pneg %p37
      %p44 = scmp.eq.s32.totalorder %s16, 1
      %p45 = por %p43, %p44
      %p46 = scmp.ne.s32.totalorder %s38, %s41
      %p47 = scmp.eq.s32.totalorder %s16, 0
      %p48 = por %p46, %p47
      %p49 = scmp.ne.s32.totalorder %s38, %s41
      %p50 = scmp.eq.s32.totalorder %s21, 1
      %p51 = por %p49, %p50
      %p52 = scmp.ne.s32.totalorder %s41, %s42
      %p53 = scmp.eq.s32.totalorder %s21, 0
      %p54 = por %p52, %p53
      %p55 = scmp.ne.s32.totalorder %s41, %s42
      %p56 = scmp.eq.s32.totalorder %s22, 1
      %p57 = por %p55, %p56
      %p59 = scmp.ne.s32.totalorder %s42, %s58
      %p60 = scmp.eq.s32.totalorder %s22, 0
      %p61 = por %p59, %p60
      %s62 = ssub.s32 %s23, %s35
      %p63 = scmp.eq.s32.totalorder %s62, 0
      %s65 = sadd.s32 %s64, 1
      %s66 = scalar_select %p63, %s64, %s65
      %p69 = pneg %p63
      %p70 = scmp.eq.s32.totalorder %s16, 1
      %p71 = por %p69, %p70
      %p72 = scmp.ne.s32.totalorder %s64, %s67
      %p73 = scmp.eq.s32.totalorder %s16, 0
      %p74 = por %p72, %p73
      %p75 = scmp.ne.s32.totalorder %s64, %s67
      %p76 = scmp.eq.s32.totalorder %s21, 1
      %p77 = por %p75, %p76
      %p78 = scmp.ne.s32.totalorder %s67, %s68
      %p79 = scmp.eq.s32.totalorder %s21, 0
      %p80 = por %p78, %p79
      %p81 = scmp.ne.s32.totalorder %s67, %s68
      %p82 = scmp.eq.s32.totalorder %s22, 1
      %p83 = por %p81, %p82
      %p85 = scmp.ne.s32.totalorder %s68, %s84
      %p86 = scmp.eq.s32.totalorder %s22, 0
      %p87 = por %p85, %p86
      %s88 = ssub.s32 %s23, %s35
      %p89 = scmp.eq.s32.totalorder %s88, 0
      %s91 = sadd.s32 %s90, 1
      %s92 = scalar_select %p89, %s90, %s91
      %p95 = pneg %p89
      %p96 = scmp.eq.s32.totalorder %s16, 1
      %p97 = por %p95, %p96
      %p98 = scmp.ne.s32.totalorder %s90, %s93
      %p99 = scmp.eq.s32.totalorder %s16, 0
      %p100 = por %p98, %p99
      %p101 = scmp.ne.s32.totalorder %s90, %s93
      %p102 = scmp.eq.s32.totalorder %s21, 1
      %p103 = por %p101, %p102
      %p104 = scmp.ne.s32.totalorder %s93, %s94
      %p105 = scmp.eq.s32.totalorder %s21, 0
      %p106 = por %p104, %p105
      %p107 = scmp.ne.s32.totalorder %s93, %s94
      %p108 = scmp.eq.s32.totalorder %s22, 1
      %p109 = por %p107, %p108
      %p111 = scmp.ne.s32.totalorder %s94, %s110
      %p112 = scmp.eq.s32.totalorder %s22, 0
      %p113 = por %p111, %p112
      %s114 = ssub.s32 %s24, %s31
      %s115 = ssub.s32 %s23, %s35
      %s116 = sor.u32 %s114, %s115
      %p117 = scmp.eq.s32.totalorder %s116, 0
      %s119 = sadd.s32 %s118, 1
      %s120 = scalar_select %p117, %s118, %s119
      %p123 = pneg %p117
      %p124 = scmp.eq.s32.totalorder %s16, 1
      %p125 = por %p123, %p124
      %p126 = scmp.ne.s32.totalorder %s118, %s121
      %p127 = scmp.eq.s32.totalorder %s16, 0
      %p128 = por %p126, %p127
      %p129 = scmp.ne.s32.totalorder %s118, %s121
      %p130 = scmp.eq.s32.totalorder %s21, 1
      %p131 = por %p129, %p130
      %p132 = scmp.ne.s32.totalorder %s121, %s122
      %p133 = scmp.eq.s32.totalorder %s21, 0
      %p134 = por %p132, %p133
      %p135 = scmp.ne.s32.totalorder %s121, %s122
      %p136 = scmp.eq.s32.totalorder %s22, 1
      %p137 = por %p135, %p136
      %p139 = scmp.ne.s32.totalorder %s122, %s138
      %p140 = scmp.eq.s32.totalorder %s22, 0
      %p141 = por %p139, %p140
      %p142 = scmp.le.s32.totalorder 1, %s16
      %p143 = scmp.lt.s32.totalorder %s16, 3
      %p144 = pnand %p142, %p143
      %p145 = pneg %p144
      // Predicated region
      $region9: #{tpu_custom_call.1} parent=5 // pred_check
        _
      $region10: #{tpu_custom_call.1} parent=5 // pred_check_branch
        %147 = sbr.rel (%p144) target = $region12
      $region11: #{tpu_custom_call.1} parent=5 // pred_region
        %s148 = ssub.s32 %s16, 1
        // Predicated region
        $region13: #{tpu_custom_call.1} parent=11 // pred_check
          %p149 = pneg %p54
        $region14: #{tpu_custom_call.1} parent=11 // pred_check_branch
          %151 = sbr.rel (%p149) target = $region16
        $region15: #{tpu_custom_call.1} parent=11 // pred_region
          %153 = vsyncadd [#allocation3], 0
          %s154 = smul.addr %s26, 2
          %s155 = smul.addr %s154, 8
          %s156 = scalar_lea.hbm %s0, %s155
          %s158 = sshll.u32 %s156, 4
          %s159 = int_to_ptr.hbm [resolvable:$true] %s158
          %s160 = sshll.u32 [#allocation2], 4
          %s161 = int_to_ptr.vmem [resolvable:$true] %s160
          %163 = dma.hbm_to_vmem [thread:$0]  %s159, 256, %s161, [#allocation3]
        $region16: #{tpu_custom_call.1} parent=11 // pred_fallthru
          _
      $region12: #{tpu_custom_call.1} parent=5 // pred_fallthru
        _
      %p164 = scmp.lt.s32.totalorder %s16, 2
      // Predicated region
      $region17: #{tpu_custom_call.1} parent=5 // pred_check
        %p165 = pneg %p164
      $region18: #{tpu_custom_call.1} parent=5 // pred_check_branch
        %167 = sbr.rel (%p165) target = $region20
      $region19: #{tpu_custom_call.1} parent=5 // pred_region
        // Predicated region
        $region21: #{tpu_custom_call.1} parent=19 // pred_check
          %p168 = pneg %p74
        $region22: #{tpu_custom_call.1} parent=19 // pred_check_branch
          %170 = sbr.rel (%p168) target = $region24
        $region23: #{tpu_custom_call.1} parent=19 // pred_region
          %s171 = sand.u32 %s16, 1
          %s172 = scalar_lea.sflag [#allocation6], %s171
          %s173 = sand.u32 %s64, 1
          %s174 = smul.addr %s173, 256
          %s175 = scalar_lea.vmem [#allocation5], %s174
          %177 = vsyncadd %s172, 0
          %s178 = smul.addr %s23, 8
          %s179 = scalar_lea.hbm %s1, %s178
          %s180 = sshll.u32 %s179, 4
          %s181 = int_to_ptr.hbm [resolvable:$true] %s180
          %s182 = sshll.u32 %s175, 4
          %s183 = int_to_ptr.vmem [resolvable:$true] %s182
          %188 = dma.hbm_to_vmem [thread:$0]  %s181, 4096, %s183, %s172, 256, 128, 8
        $region24: #{tpu_custom_call.1} parent=19 // pred_fallthru
          _
        // Predicated region
        $region25: #{tpu_custom_call.1} parent=19 // pred_check
          %p189 = pneg %p100
        $region26: #{tpu_custom_call.1} parent=19 // pred_check_branch
          %191 = sbr.rel (%p189) target = $region28
        $region27: #{tpu_custom_call.1} parent=19 // pred_region
          %s192 = sand.u32 %s16, 1
          %s193 = scalar_lea.sflag [#allocation6], %s192
          %s194 = sand.u32 %s90, 1
          %s195 = scalar_lea.vmem [#allocation7], %s194
          %197 = vsyncadd %s193, 0
          %s198 = scalar_lea.hbm %s2, %s23
          %s200 = sshll.u32 %s198, 4
          %s201 = int_to_ptr.hbm [resolvable:$true] %s200
          %s202 = sshll.u32 %s195, 4
          %s203 = int_to_ptr.vmem [resolvable:$true] %s202
          %205 = dma.hbm_to_vmem [thread:$0]  %s201, 16, %s203, %s193
        $region28: #{tpu_custom_call.1} parent=19 // pred_fallthru
          _
      $region20: #{tpu_custom_call.1} parent=5 // pred_fallthru
        _
      %p206 = scmp.le.s32.totalorder 1, %s16
      %p207 = scmp.lt.s32.totalorder %s16, 3
      %p208 = pnand %p206, %p207
      %p209 = pneg %p208
      // Predicated region
      $region29: #{tpu_custom_call.1} parent=5 // pred_check
        _
      $region30: #{tpu_custom_call.1} parent=5 // pred_check_branch
        %211 = sbr.rel (%p208) target = $region32
      $region31: #{tpu_custom_call.1} parent=5 // pred_region
        %s212 = ssub.s32 %s16, 1
        // Predicated region
        $region33: #{tpu_custom_call.1} parent=31 // pred_check
          %p213 = pneg %p54
        $region34: #{tpu_custom_call.1} parent=31 // pred_check_branch
          %215 = sbr.rel (%p213) target = $region36
        $region35: #{tpu_custom_call.1} parent=31 // pred_region
          %217 = dma.done [#allocation3], 256
        $region36: #{tpu_custom_call.1} parent=31 // pred_fallthru
          _
        %s218 = sand.u32 %s21, 1
        %s219 = scalar_lea.sflag [#allocation6], %s218
        %s220 = sand.u32 %s67, 1
        %s221 = smul.addr %s220, 256
        %s222 = scalar_lea.vmem [#allocation5], %s221
        // Predicated region
        $region37: #{tpu_custom_call.1} parent=31 // pred_check
          %p223 = pneg %p80
        $region38: #{tpu_custom_call.1} parent=31 // pred_check_branch
          %225 = sbr.rel (%p223) target = $region40
        $region39: #{tpu_custom_call.1} parent=31 // pred_region
          %227 = dma.done %s219, 4096
        $region40: #{tpu_custom_call.1} parent=31 // pred_fallthru
          _
        %s228 = sand.u32 %s21, 1
        %s229 = scalar_lea.sflag [#allocation6], %s228
        %s230 = sand.u32 %s93, 1
        %s231 = scalar_lea.vmem [#allocation7], %s230
        // Predicated region
        $region41: #{tpu_custom_call.1} parent=31 // pred_check
          %p232 = pneg %p106
        $region42: #{tpu_custom_call.1} parent=31 // pred_check_branch
          %234 = sbr.rel (%p232) target = $region44
        $region43: #{tpu_custom_call.1} parent=31 // pred_region
          %236 = dma.done %s229, 16
        $region44: #{tpu_custom_call.1} parent=31 // pred_fallthru
          _
        %p237 = pneg %p54
        %p238 = pneg %p51
        %s239 = sand.u32 %s21, 1
        %s240 = scalar_lea.sflag [#allocation6], %s239
        %s241 = sand.u32 %s67, 1
        %s242 = smul.addr %s241, 256
        %s243 = scalar_lea.vmem [#allocation5], %s242
        %p244 = pneg %p80
        %p245 = pneg %p77
        %s246 = sand.u32 %s21, 1
        %s247 = scalar_lea.sflag [#allocation6], %s246
        %s248 = sand.u32 %s93, 1
        %s249 = scalar_lea.vmem [#allocation7], %s248
        %p250 = pneg %p106
        %p251 = pneg %p103
        %p252 = pneg %p134
        %p253 = pneg %p131
        %s254 = sand.u32 %s121, 1
        %s255 = scalar_lea.sflag [#allocation4], %s254
        %s256 = sand.u32 %s121, 1
        %s257 = smul.addr %s256, 8
        %s258 = scalar_lea.vmem [#allocation8], %s257
        %v259 = vld [vmem:[#allocation2] sm:$0xff]
        %v260 = vld [vmem:[#allocation2 + $0x8] sm:$0xff]
        %v261 = vld [vmem:[%s222] sm:$0xff]
        %v262 = vld [vmem:[%s222 + $0x8] sm:$0xff]
        %v263 = vld [vmem:[%s222 + $0x10] sm:$0xff]
        %v264 = vld [vmem:[%s222 + $0x18] sm:$0xff]
        %v265 = vld [vmem:[%s222 + $0x20] sm:$0xff]
        %v266 = vld [vmem:[%s222 + $0x28] sm:$0xff]
        %v267 = vld [vmem:[%s222 + $0x30] sm:$0xff]
        %v268 = vld [vmem:[%s222 + $0x38] sm:$0xff]
        %v269 = vld [vmem:[%s222 + $0x40] sm:$0xff]
        %v270 = vld [vmem:[%s222 + $0x48] sm:$0xff]
        %v271 = vld [vmem:[%s222 + $0x50] sm:$0xff]
        %v272 = vld [vmem:[%s222 + $0x58] sm:$0xff]
        %v273 = vld [vmem:[%s222 + $0x60] sm:$0xff]
        %v274 = vld [vmem:[%s222 + $0x68] sm:$0xff]
        %v275 = vld [vmem:[%s222 + $0x70] sm:$0xff]
        %v276 = vld [vmem:[%s222 + $0x78] sm:$0xff]
        %v277 = vld [vmem:[%s222 + $0x80] sm:$0xff]
        %v278 = vld [vmem:[%s222 + $0x88] sm:$0xff]
        %v279 = vld [vmem:[%s222 + $0x90] sm:$0xff]
        %v280 = vld [vmem:[%s222 + $0x98] sm:$0xff]
        %v281 = vld [vmem:[%s222 + $0xa0] sm:$0xff]
        %v282 = vld [vmem:[%s222 + $0xa8] sm:$0xff]
        %v283 = vld [vmem:[%s222 + $0xb0] sm:$0xff]
        %v284 = vld [vmem:[%s222 + $0xb8] sm:$0xff]
        %v285 = vld [vmem:[%s222 + $0xc0] sm:$0xff]
        %v286 = vld [vmem:[%s222 + $0xc8] sm:$0xff]
        %v287 = vld [vmem:[%s222 + $0xd0] sm:$0xff]
        %v288 = vld [vmem:[%s222 + $0xd8] sm:$0xff]
        %v289 = vld [vmem:[%s222 + $0xe0] sm:$0xff]
        %v290 = vld [vmem:[%s222 + $0xe8] sm:$0xff]
        %v291 = vld [vmem:[%s222 + $0xf0] sm:$0xff]
        %v292 = vld [vmem:[%s222 + $0xf8] sm:$0xff]
        %v293 = vld [vmem:[%s231] sm:$0x1]
        %v295 = vperm.slane %v293, 0
        %297 = vmatpush.msra.mxu0 %v276
        %298 = vmatpush.msra.mxu0 %v275
        %299 = vmatpush.msra.mxu0 %v274
        %300 = vmatpush.msra.mxu0 %v273
        %301 = vmatpush.msra.mxu0 %v272
        %302 = vmatpush.msra.mxu0 %v271
        %303 = vmatpush.msra.mxu0 %v270
        %304 = vmatpush.msra.mxu0 %v269
        %305 = vmatpush.msra.mxu0 %v268
        %306 = vmatpush.msra.mxu0 %v267
        %307 = vmatpush.msra.mxu0 %v266
        %308 = vmatpush.msra.mxu0 %v265
        %309 = vmatpush.msra.mxu0 %v264
        %310 = vmatpush.msra.mxu0 %v263
        %311 = vmatpush.msra.mxu0 %v262
        %312 = vmatpush.msra.mxu0 %v261
        %313 = vmatmul.f32.gmra.mxu0 %v259
        %v314 = vpop.f32.mrf.mxu0
        %v315 = vadd.f32 %v295, %v314
        %316 = vdwg.mxu0
        %317 = vmatpush.msra.mxu0 %v292
        %318 = vmatpush.msra.mxu0 %v291
        %319 = vmatpush.msra.mxu0 %v290
        %320 = vmatpush.msra.mxu0 %v289
        %321 = vmatpush.msra.mxu0 %v288
        %322 = vmatpush.msra.mxu0 %v287
        %323 = vmatpush.msra.mxu0 %v286
        %324 = vmatpush.msra.mxu0 %v285
        %325 = vmatpush.msra.mxu0 %v284
        %326 = vmatpush.msra.mxu0 %v283
        %327 = vmatpush.msra.mxu0 %v282
        %328 = vmatpush.msra.mxu0 %v281
        %329 = vmatpush.msra.mxu0 %v280
        %330 = vmatpush.msra.mxu0 %v279
        %331 = vmatpush.msra.mxu0 %v278
        %332 = vmatpush.msra.mxu0 %v277
        %333 = vmatmul.f32.gmra.mxu0 %v260
        %v334 = vpop.f32.mrf.mxu0
        %v335 = vadd.f32 %v315, %v334
        %336 = vdwg.mxu0
        %v337 = vmax.f32 %v335, 0.0
        %s338 = smul.u32 %s25, 128
        %s339 = sshra.s32 %s338, 7
        %s340 = sand.u32 %s338, 127
        %s341 = smul.addr %s339, 8
        %s342 = scalar_lea.vmem [#allocation2], %s341
        %v343 = vld [vmem:[%s342] sm:$0xff]
        %v344 = vadd.f32 %v343, %v337
        %345 = vst [vmem:[%s258] sm:$0xff] %v344
        %s346 = sand.u32 %s121, 1
        %s347 = scalar_lea.sflag [#allocation4], %s346
        %s348 = sand.u32 %s121, 1
        %s349 = smul.addr %s348, 8
        %s350 = scalar_lea.vmem [#allocation8], %s349
        // Predicated region
        $region45: #{tpu_custom_call.1} parent=31 // pred_check
          %p351 = pneg %p131
        $region46: #{tpu_custom_call.1} parent=31 // pred_check_branch
          %353 = sbr.rel (%p351) target = $region48
        $region47: #{tpu_custom_call.1} parent=31 // pred_region
          %355 = vsyncadd %s347, 0
          %s356 = smul.addr %s26, 2
          %s357 = sadd.s32 %s25, %s356
          %s358 = smul.addr %s357, 8
          %s359 = scalar_lea.hbm %s3, %s358
          %s361 = sshll.u32 %s350, 4
          %s362 = int_to_ptr.vmem [resolvable:$true] %s361
          %s363 = sshll.u32 %s359, 4
          %s364 = int_to_ptr.hbm [resolvable:$true] %s363
          %366 = dma.vmem_to_hbm [thread:$0]  %s362, 128, %s364, %s347
        $region48: #{tpu_custom_call.1} parent=31 // pred_fallthru
          _
      $region32: #{tpu_custom_call.1} parent=5 // pred_fallthru
        _
      %p367 = scmp.le.s32.totalorder 2, %s16
      // Predicated region
      $region49: #{tpu_custom_call.1} parent=5 // pred_check
        %p368 = pneg %p367
      $region50: #{tpu_custom_call.1} parent=5 // pred_check_branch
        %370 = sbr.rel (%p368) target = $region52
      $region51: #{tpu_custom_call.1} parent=5 // pred_region
        %s371 = ssub.s32 %s16, 2
        // Predicated region
        $region53: #{tpu_custom_call.1} parent=51 // pred_check
          %p372 = pneg %p137
        $region54: #{tpu_custom_call.1} parent=51 // pred_check_branch
          %374 = sbr.rel (%p372) target = $region56
        $region55: #{tpu_custom_call.1} parent=51 // pred_region
          %s375 = sand.u32 %s122, 1
          %s376 = scalar_lea.sflag [#allocation4], %s375
          %s377 = sand.u32 %s122, 1
          %s378 = smul.addr %s377, 8
          %s379 = scalar_lea.vmem [#allocation8], %s378
          %381 = dma.done %s376, 128
        $region56: #{tpu_custom_call.1} parent=51 // pred_fallthru
          _
      $region52: #{tpu_custom_call.1} parent=5 // pred_fallthru
        _
    $region6: #{tpu_custom_call.1} parent=1 // loop_footer
      %s20 = sadd.s32 1, %s16
    $region7: #{tpu_custom_call.1} parent=1 // loop_footer_branch
      %15 = sbr.rel target = $region3
    $region8: #{tpu_custom_call.1} parent=1 // loop_exit
      _
    %382 = vsyncpa [#allocation3], 1
    %s383 = scalar_lea.sflag [#allocation3], 1
    %384 = vsyncpa %s383, 1
    %385 = vsyncpa [#allocation6], 1
    %s386 = scalar_lea.sflag [#allocation6], 1
    %387 = vsyncpa %s386, 1
    %388 = vsyncpa [#allocation4], 1
    %s389 = scalar_lea.sflag [#allocation4], 1
    %390 = vsyncpa %s389, 1

</llo_original>
